<compile_context>
chip_gen: v6e
topology: v6e:2x2x1
jax: 0.10.0
libtpu: 0.0.40
codegen_flags: <defaults>
</compile_context>

<pallas_src>
import functools
import math

import jax
import jax.numpy as jnp
from jax import lax
from jax.experimental import pallas as pl
from jax.experimental.pallas import tpu as pltpu

EPS = 1e-8
_NEG_SENTINEL = -3.0  # strictly below any unit-vector dot product (>= -1)


def _round_up(v, m):
    return int(pl.cdiv(v, m) * m)


def _vmem_bytes(tm, tn, d_pad, in_bytes):
    """Rough per-step VMEM footprint: double-buffered operands + scratch + temps."""
    operands = 2 * (tm * d_pad + d_pad * tn) * in_bytes   # row tile + candidate tile
    scratch = tm * tn * 4                                  # running-max scratch
    temps = tm * tn * 4                                    # f32 dots tile
    out = 2 * tm * 4
    return operands + scratch + temps + out


def _auto_tiles(n_pad, d_pad, in_bytes, budget):
    # Single-shot fast path: typical KoLeo batches (N in the hundreds).
    if n_pad <= 512 and _vmem_bytes(n_pad, n_pad, d_pad, in_bytes) <= budget:
        return n_pad, n_pad
    # Candidate-resident: one column tile -> x is streamed from HBM exactly once.
    for tm in (512, 256, 128):
        if n_pad % tm == 0 and _vmem_bytes(tm, n_pad, d_pad, in_bytes) <= budget:
            return tm, n_pad
    # General streaming case: large square tiles (multiples of 256 feed the
    # 256-wide MXU on v6e/v7x; still 128-aligned for v5e's 128-wide MXU).
    for t in (512, 256, 128):
        if _vmem_bytes(t, t, d_pad, in_bytes) <= budget:
            return t, t
    return 128, 128


def _koleo_kernel(xr_ref, xt_ref, out_ref, maxdot_ref, *, n_valid, n_pad):
    i = pl.program_id(0)        # row tile index        ("parallel")
    j = pl.program_id(1)        # candidate tile index  ("arbitrary" reduction)
    tm = xr_ref.shape[0]
    tn = xt_ref.shape[1]

    @pl.when(j == 0)
    def _():
        maxdot_ref[...] = jnp.full(maxdot_ref.shape, _NEG_SENTINEL, jnp.float32)

    # Pure MXU work: operands arrive pre-normalized and pre-cast; candidates
    # are already in (K, N) layout so no per-tile transpose competes with the
    # vmatmul pushes for the vector-extended slots.
    dots = jnp.dot(xr_ref[...], xt_ref[...], preferred_element_type=jnp.float32)

    # Tile-local masks (VALU): diagonal -> -1 exactly as torch; padded
    # candidate columns (only exist when n_valid != n_pad) -> below -1.
    row_l = lax.broadcasted_iota(jnp.int32, (tm, tn), 0)
    col_l = lax.broadcasted_iota(jnp.int32, (tm, tn), 1)
    dots = jnp.where((col_l - row_l) == (i * tm - j * tn), jnp.float32(-1.0), dots)
    if n_valid != n_pad:
        dots = jnp.where(col_l >= n_valid - j * tn,
                         jnp.float32(_NEG_SENTINEL), dots)

    # Elementwise running max (VALU, hides under the MXU). The cross-lane
    # reduction is deferred to the epilogue so the XLU never shares the
    # vector-extended slots with vmatmul in the steady state.
    maxdot_ref[...] = jnp.maximum(maxdot_ref[...], dots)

    # Epilogue: once per row tile.
    @pl.when(j == pl.num_programs(1) - 1)
    def _():
        max_dot = jnp.max(maxdot_ref[...], axis=1, keepdims=True)
        # Unit-norm identity: ||xi - xj||^2 = 2 - 2<xi, xj>, clamped at 0.
        # TODO(synk): PairwiseDistance adds eps inside the difference before
        # the norm; the dot-product identity omits that O(eps) term.
        dist = jnp.sqrt(jnp.maximum(2.0 - 2.0 * max_dot, 0.0))
        neg_log = -jnp.log(dist + EPS)
        if n_valid != n_pad:
            row_g = i * tm + lax.broadcasted_iota(jnp.int32, (tm, 1), 0)
            neg_log = jnp.where(row_g < n_valid, neg_log, jnp.float32(0.0))
        out_ref[...] = neg_log


def koleo_loss(student_output, *, matmul_dtype=jnp.float32, tm=None, tn=None,
               vmem_budget_bytes=24 << 20):
    """student_output: (N, D) array -> scalar float32 KoLeo loss.

    matmul_dtype=jnp.bfloat16 gives ~3-6x MXU throughput and halves operand
    DMA/VMEM bytes, at ~1e-3 absolute error on the max dot product; the
    default keeps f32 parity with the (autocast-disabled) PyTorch reference.
    """
    n, d = student_output.shape
    d_pad = _round_up(d, 128)
    in_bytes = jnp.dtype(matmul_dtype).itemsize

    auto_tm, auto_tn = _auto_tiles(_round_up(n, 128), d_pad, in_bytes,
                                   vmem_budget_bytes)
    tm = auto_tm if tm is None else tm
    tn = auto_tn if tn is None else tn
    assert tm % 8 == 0 and tn % 128 == 0, "tiles must be (8,128)-aligned"
    n_pad = _round_up(n, math.lcm(tm, tn))

    # Hoisted out of the grid loop: pad (zero rows/cols change neither norms
    # nor dot products), L2-normalize ONCE in f32, cast ONCE to the matmul
    # dtype, and pre-transpose the candidate operand into (K, N) layout.
    x = student_output.astype(jnp.float32)
    if (n_pad, d_pad) != (n, d):
        x = jnp.pad(x, ((0, n_pad - n), (0, d_pad - d)))
    norm = jnp.sqrt(jnp.sum(x * x, axis=-1, keepdims=True))
    xn = (x / jnp.maximum(norm, EPS)).astype(matmul_dtype)   # (N, D) query rows
    xt = xn.T                                                # (D, N) candidates

    grid = (n_pad // tm, n_pad // tn)
    kernel = functools.partial(_koleo_kernel, n_valid=n, n_pad=n_pad)
    vmem_limit = int(min(max(_vmem_bytes(tm, tn, d_pad, in_bytes) + (4 << 20),
                             32 << 20),
                         48 << 20))   # capped below v7x's 64 MiB physical VMEM

    neg_log_dist = pl.pallas_call(
        kernel,
        out_shape=jax.ShapeDtypeStruct((n_pad, 1), jnp.float32),
        grid_spec=pltpu.PrefetchScalarGridSpec(
            num_scalar_prefetch=0,
            grid=grid,
            in_specs=[
                pl.BlockSpec((tm, d_pad), lambda i, j: (i, 0)),   # query rows
                pl.BlockSpec((d_pad, tn), lambda i, j: (0, j)),   # candidates (K,N)
            ],
            out_specs=pl.BlockSpec((tm, 1), lambda i, j: (i, 0)),
            scratch_shapes=[
                pltpu.VMEM((tm, tn), jnp.float32),   # elementwise running max
            ],
        ),
        compiler_params=pltpu.CompilerParams(
            dimension_semantics=("parallel", "arbitrary"),
            vmem_limit_bytes=vmem_limit),
    )(xn, xt)

    return jnp.sum(neg_log_dist) / jnp.float32(n)


def koleo_loss_ref(student_output, eps=EPS):
    """Pure-JAX mirror of the PyTorch forward (explicit gather + eps-in-diff)."""
    x = student_output.astype(jnp.float32)
    norm = jnp.sqrt(jnp.sum(x * x, axis=-1, keepdims=True))
    xn = x / jnp.maximum(norm, eps)
    dots = xn @ xn.T
    n = xn.shape[0]
    dots = dots.at[jnp.arange(n), jnp.arange(n)].set(-1.0)
    idx = jnp.argmax(dots, axis=1)
    diff = xn - xn[idx] + eps
    dist = jnp.sqrt(jnp.sum(diff * diff, axis=-1))
    return -jnp.mean(jnp.log(dist + eps))


if __name__ == "__main__":
    key = jax.random.PRNGKey(0)
    k1, k2 = jax.random.split(key)

    # Case 1: small batch -> single-shot fast path (grid (1,1)), f32 matmul.
    n1, d1 = 16, 64
    x1 = jax.random.normal(k1, (n1, d1), dtype=jnp.float32)
    loss1 = koleo_loss(x1)
    jax.block_until_ready(loss1)
    ref1 = koleo_loss_ref(x1)
    assert jnp.allclose(loss1, ref1, atol=1e-5, rtol=1e-5), (loss1, ref1)

    # Case 2: force small tiles to exercise the multi-tile path (grid (2,2):
    # running-max scratch, init/epilogue gating, diagonal + padding masks).
    n2, d2 = 200, 96
    x2 = jax.random.normal(k2, (n2, d2), dtype=jnp.float32)
    loss2 = koleo_loss(x2, tm=128, tn=128)
    jax.block_until_ready(loss2)
    ref2 = koleo_loss_ref(x2)
    assert jnp.allclose(loss2, ref2, atol=1e-5, rtol=1e-5), (loss2, ref2)

    # Case 3: auto tiles (candidate-resident, grid (1,1)) with the fast bf16
    # MXU path; looser tolerance against the f32 reference.
    loss3 = koleo_loss(x2, matmul_dtype=jnp.bfloat16)
    jax.block_until_ready(loss3)
    assert jnp.allclose(loss3, ref2, atol=2e-2, rtol=2e-2), (loss3, ref2)

    print("KERNEL_OK")
</pallas_src>

<mosaic_0001>
module attributes {stable_mosaic.version = 11 : i64} {
  func.func @_koleo_kernel(%arg0: i32, %arg1: i32, %arg2: memref<128x128xf32, #tpu.memory_space<vmem>>, %arg3: memref<128x128xf32, #tpu.memory_space<vmem>>, %arg4: memref<128x1xf32, #tpu.memory_space<vmem>>, %arg5: memref<128x128xf32, #tpu.memory_space<vmem>>) attributes {dimension_semantics = [#tpu.dimension_semantics<parallel>, #tpu.dimension_semantics<arbitrary>], iteration_bounds = array<i64: 1, 1>, scalar_prefetch = 0 : i64, scratch_operands = 1 : i64, tpu.core_type = #tpu.core_type<tc>, window_params = [{transform_indices = @transform_0, window_bounds = array<i64: 128, 128>}, {transform_indices = @transform_1, window_bounds = array<i64: 128, 128>}, {transform_indices = @transform_2, window_bounds = array<i64: 128, 1>}]} {
    %c0_i32 = arith.constant 0 : i32
    %0 = arith.cmpi eq, %arg1, %c0_i32 : i32
    %1 = arith.extui %0 : i1 to i32
    %c0_i32_0 = arith.constant 0 : i32
    %2 = arith.cmpi ne, %1, %c0_i32_0 : i32
    scf.if %2 {
      %cst_14 = arith.constant -3.000000e+00 : f32
      %28 = vector.broadcast %cst_14 : f32 to vector<128x128xf32>
      %c0_15 = arith.constant 0 : index
      %c0_16 = arith.constant 0 : index
      %29 = vector.load %arg5[%c0_15, %c0_16] : memref<128x128xf32, #tpu.memory_space<vmem>>, vector<128x128xf32>
      tpu.vector_store %arg5[%c0_15, %c0_16], %28 {strides = array<i32>} : memref<128x128xf32, #tpu.memory_space<vmem>>, vector<128x128xf32>,
    } else {
    }
    %c0 = arith.constant 0 : index
    %c0_1 = arith.constant 0 : index
    %3 = vector.load %arg2[%c0, %c0_1] : memref<128x128xf32, #tpu.memory_space<vmem>>, vector<128x128xf32>
    %c0_2 = arith.constant 0 : index
    %c0_3 = arith.constant 0 : index
    %4 = vector.load %arg3[%c0_2, %c0_3] : memref<128x128xf32, #tpu.memory_space<vmem>>, vector<128x128xf32>
    %cst = arith.constant dense<0.000000e+00> : vector<128x128xf32>
    %5 = tpu.matmul %3, %4, %cst {dimension_numbers = #tpu.dot_dimension_numbers<[1], [0], [0], [1], [0, 0, 1, 1], [], []>} : vector<128x128xf32>, vector<128x128xf32>, vector<128x128xf32> -> vector<128x128xf32>
    %6 = tpu.iota {dimensions = array<i32: 0>} : vector<128x128xi32>
    %7 = tpu.iota {dimensions = array<i32: 1>} : vector<128x128xi32>
    %8 = arith.subi %7, %6 : vector<128x128xi32>
    %c128_i32 = arith.constant 128 : i32
    %9 = arith.muli %arg0, %c128_i32 : i32
    %c128_i32_4 = arith.constant 128 : i32
    %10 = arith.muli %arg1, %c128_i32_4 : i32
    %11 = arith.subi %9, %10 : i32
    %12 = vector.broadcast %11 : i32 to vector<128x128xi32>
    %13 = arith.cmpi eq, %8, %12 : vector<128x128xi32>
    %cst_5 = arith.constant -1.000000e+00 : f32
    %14 = vector.broadcast %cst_5 : f32 to vector<128x128xf32>
    %15 = arith.select %13, %14, %5 : vector<128x128xi1>, vector<128x128xf32>
    %c128_i32_6 = arith.constant 128 : i32
    %16 = arith.muli %arg1, %c128_i32_6 : i32
    %c16_i32 = arith.constant 16 : i32
    %17 = arith.subi %c16_i32, %16 : i32
    %18 = vector.broadcast %17 : i32 to vector<128x128xi32>
    %19 = arith.cmpi sge, %7, %18 : vector<128x128xi32>
    %cst_7 = arith.constant -3.000000e+00 : f32
    %20 = vector.broadcast %cst_7 : f32 to vector<128x128xf32>
    %21 = arith.select %19, %20, %15 : vector<128x128xi1>, vector<128x128xf32>
    %c0_8 = arith.constant 0 : index
    %c0_9 = arith.constant 0 : index
    %22 = vector.load %arg5[%c0_8, %c0_9] : memref<128x128xf32, #tpu.memory_space<vmem>>, vector<128x128xf32>
    %23 = arith.maximumf %22, %21 : vector<128x128xf32>
    %c0_10 = arith.constant 0 : index
    %c0_11 = arith.constant 0 : index
    %24 = vector.load %arg5[%c0_10, %c0_11] : memref<128x128xf32, #tpu.memory_space<vmem>>, vector<128x128xf32>
    tpu.vector_store %arg5[%c0_10, %c0_11], %23 {strides = array<i32>} : memref<128x128xf32, #tpu.memory_space<vmem>>, vector<128x128xf32>,
    %c0_i32_12 = arith.constant 0 : i32
    %25 = arith.cmpi eq, %arg1, %c0_i32_12 : i32
    %26 = arith.extui %25 : i1 to i32
    %c0_i32_13 = arith.constant 0 : i32
    %27 = arith.cmpi ne, %26, %c0_i32_13 : i32
    scf.if %27 {
      %c0_14 = arith.constant 0 : index
      %c0_15 = arith.constant 0 : index
      %28 = vector.load %arg5[%c0_14, %c0_15] : memref<128x128xf32, #tpu.memory_space<vmem>>, vector<128x128xf32>
      %cst_16 = arith.constant dense<0xFF800000> : vector<128xf32>
      %29 = vector.multi_reduction <maximumf>, %28, %cst_16 [1] : vector<128x128xf32> to vector<128xf32>
      %30 = vector.shape_cast %29 : vector<128xf32> to vector<128x1xf32>
      %cst_17 = arith.constant 2.000000e+00 : f32
      %31 = vector.broadcast %cst_17 : f32 to vector<128x1xf32>
      %32 = arith.mulf %31, %30 : vector<128x1xf32>
      %cst_18 = arith.constant 2.000000e+00 : f32
      %33 = vector.broadcast %cst_18 : f32 to vector<128x1xf32>
      %34 = arith.subf %33, %32 : vector<128x1xf32>
      %cst_19 = arith.constant 0.000000e+00 : f32
      %35 = vector.broadcast %cst_19 : f32 to vector<128x1xf32>
      %36 = arith.maximumf %34, %35 : vector<128x1xf32>
      %37 = math.sqrt %36 : vector<128x1xf32>
      %cst_20 = arith.constant 9.99999993E-9 : f32
      %38 = vector.broadcast %cst_20 : f32 to vector<128x1xf32>
      %39 = arith.addf %37, %38 : vector<128x1xf32>
      %40 = math.log %39 : vector<128x1xf32>
      %cst_21 = arith.constant 0.000000e+00 : f32
      %41 = vector.broadcast %cst_21 : f32 to vector<128x1xf32>
      %42 = arith.subf %41, %40 : vector<128x1xf32>
      %c128_i32_22 = arith.constant 128 : i32
      %43 = arith.muli %arg0, %c128_i32_22 : i32
      %44 = tpu.iota {dimensions = array<i32: 0>} : vector<128x1xi32>
      %45 = vector.broadcast %43 : i32 to vector<128x1xi32>
      %46 = arith.addi %45, %44 : vector<128x1xi32>
      %c16_i32_23 = arith.constant 16 : i32
      %47 = vector.broadcast %c16_i32_23 : i32 to vector<128x1xi32>
      %48 = arith.cmpi slt, %46, %47 : vector<128x1xi32>
      %cst_24 = arith.constant 0.000000e+00 : f32
      %49 = vector.broadcast %cst_24 : f32 to vector<128x1xf32>
      %50 = arith.select %48, %42, %49 : vector<128x1xi1>, vector<128x1xf32>
      %c0_25 = arith.constant 0 : index
      %c0_26 = arith.constant 0 : index
      %51 = vector.load %arg4[%c0_25, %c0_26] : memref<128x1xf32, #tpu.memory_space<vmem>>, vector<128x1xf32>
      tpu.vector_store %arg4[%c0_25, %c0_26], %50 {strides = array<i32>} : memref<128x1xf32, #tpu.memory_space<vmem>>, vector<128x1xf32>,
    } else {
    }
    return
  }
  func.func @transform_0(%arg0: i32, %arg1: i32) -> (i32, i32) {
    %c0_i32 = arith.constant 0 : i32
    %c0_i32_0 = arith.constant 0 : i32
    return %arg0, %c0_i32 : i32, i32
  }
  func.func @transform_1(%arg0: i32, %arg1: i32) -> (i32, i32) {
    %c0_i32 = arith.constant 0 : i32
    %c0_i32_0 = arith.constant 0 : i32
    return %c0_i32, %arg1 : i32, i32
  }
  func.func @transform_2(%arg0: i32, %arg1: i32) -> (i32, i32) {
    %c0_i32 = arith.constant 0 : i32
    %c0_i32_0 = arith.constant 0 : i32
    return %arg0, %c0_i32 : i32, i32
  }
}

</mosaic_0001>

<llo_original>
// kernel: tpu_custom_call.1
$region0: #{tpu_custom_call.1}
  #allocation0 [shape = 'u32[]', space=smem, size = 0x4, offset = 0x4, fixed_abs, tag = 'smem constant byte address 0x4 - core index']
  #allocation1 [shape = 'u32[144,128]{1,0:T(1,128)}', space=vmem, size = 0x12000, scoped, tag = 'internal scratch']
  #allocation2 [shape = 'f32[128,128]{1,0:T(8,128)}', space=vmem, size = 0x10000, scoped, tag = 'scratch operand']
  %s0 = inlined_call_operand.hbm [shape: f32[128,128], index: 0, kind: input, shape index: {}]
  %s1 = inlined_call_operand.hbm [shape: f32[128,128], index: 1, kind: input, shape index: {}]
  %s2 = inlined_call_operand.vmem [shape: f32[128,1], index: 2, kind: output, shape index: {}]
  %s3 = sld [smem:[#allocation0]]
  $region34: #{tpu_custom_call.1} parent=0
    _
  %s5 = ssub.s32 1, %s3
  %s6 = scalar_select 0, %s5, %s3
  $region1: #{tpu_custom_call.1} parent=0
    #allocation3 [shape = 'u8[65536]{0}', space=vmem, size = 0x10000, scoped, tag = 'input window, operand 0, single buffered']
    #allocation4 [shape = 's32[1]{0}', space=sflag, size = 0x4, scoped, tag = 'scoped memory for tpu_custom_call.1']
    #allocation5 [shape = 'u8[65536]{0}', space=vmem, size = 0x10000, scoped, tag = 'input window, operand 1, single buffered']
    #allocation6 [shape = 's32[1]{0}', space=sflag, size = 0x4, scoped, tag = 'scoped memory for tpu_custom_call.1']
    %7 = vsyncpa [#allocation4], 0
    %8 = vsyncpa [#allocation6], 0
    // Predicated region
    $region2: #{tpu_custom_call.1} parent=1 // pred_check
      _
    $region3: #{tpu_custom_call.1} parent=1 // pred_check_branch
      %10 = sbr.rel (0) target = $region5
    $region4: #{tpu_custom_call.1} parent=1 // pred_region
      %s12 = ssub.s32 2048, 2048
      %13 = vsyncadd [#allocation4], %s12
      %s14 = sshll.u32 [#allocation3], 4
      %s15 = int_to_ptr.vmem [resolvable:$true] %s14
      %20 = dma.hbm_to_vmem [thread:$0]  %s0, 2048, %s15, [#allocation4], 128, 128, 8
    $region5: #{tpu_custom_call.1} parent=1 // pred_fallthru
      _
    // Predicated region
    $region6: #{tpu_custom_call.1} parent=1 // pred_check
      _
    $region7: #{tpu_custom_call.1} parent=1 // pred_check_branch
      %22 = sbr.rel (0) target = $region9
    $region8: #{tpu_custom_call.1} parent=1 // pred_region
      %s24 = ssub.s32 2048, 2048
      %25 = vsyncadd [#allocation6], %s24
      %s26 = sshll.u32 [#allocation5], 4
      %s27 = int_to_ptr.vmem [resolvable:$true] %s26
      %32 = dma.hbm_to_vmem [thread:$0]  %s1, 2048, %s27, [#allocation6], 128, 128, 8
    $region9: #{tpu_custom_call.1} parent=1 // pred_fallthru
      _
    // Predicated region
    $region10: #{tpu_custom_call.1} parent=1 // pred_check
      _
    $region11: #{tpu_custom_call.1} parent=1 // pred_check_branch
      %34 = sbr.rel (0) target = $region13
    $region12: #{tpu_custom_call.1} parent=1 // pred_region
      %35 = dma.done [#allocation4], 2048
    $region13: #{tpu_custom_call.1} parent=1 // pred_fallthru
      _
    // Predicated region
    $region14: #{tpu_custom_call.1} parent=1 // pred_check
      _
    $region15: #{tpu_custom_call.1} parent=1 // pred_check_branch
      %37 = sbr.rel (0) target = $region17
    $region16: #{tpu_custom_call.1} parent=1 // pred_region
      %38 = dma.done [#allocation6], 2048
    $region17: #{tpu_custom_call.1} parent=1 // pred_fallthru
      _
    %p39 = scmp.eq.s32.totalorder 0, 0
    // Predicated region
    $region18: #{tpu_custom_call.1} parent=1 // pred_check
      %p40 = pneg %p39
    $region19: #{tpu_custom_call.1} parent=1 // pred_check_branch
      %42 = sbr.rel (%p40) target = $region21
    $region20: #{tpu_custom_call.1} parent=1 // pred_region
      %43 = vst [vmem:[#allocation2] sm:$0xff] -3.0
      %44 = vst [vmem:[#allocation2 + $0x8] sm:$0xff] -3.0
      %45 = vst [vmem:[#allocation2 + $0x10] sm:$0xff] -3.0
      %46 = vst [vmem:[#allocation2 + $0x18] sm:$0xff] -3.0
      %47 = vst [vmem:[#allocation2 + $0x20] sm:$0xff] -3.0
      %48 = vst [vmem:[#allocation2 + $0x28] sm:$0xff] -3.0
      %49 = vst [vmem:[#allocation2 + $0x30] sm:$0xff] -3.0
      %50 = vst [vmem:[#allocation2 + $0x38] sm:$0xff] -3.0
      %51 = vst [vmem:[#allocation2 + $0x40] sm:$0xff] -3.0
      %52 = vst [vmem:[#allocation2 + $0x48] sm:$0xff] -3.0
      %53 = vst [vmem:[#allocation2 + $0x50] sm:$0xff] -3.0
      %54 = vst [vmem:[#allocation2 + $0x58] sm:$0xff] -3.0
      %55 = vst [vmem:[#allocation2 + $0x60] sm:$0xff] -3.0
      %56 = vst [vmem:[#allocation2 + $0x68] sm:$0xff] -3.0
      %57 = vst [vmem:[#allocation2 + $0x70] sm:$0xff] -3.0
      %58 = vst [vmem:[#allocation2 + $0x78] sm:$0xff] -3.0
    $region21: #{tpu_custom_call.1} parent=1 // pred_fallthru
      _
    %v59 = vld [vmem:[#allocation3] sm:$0xff]
    %v60 = vld [vmem:[#allocation3 + $0x8] sm:$0xff]
    %v61 = vld [vmem:[#allocation3 + $0x10] sm:$0xff]
    %v62 = vld [vmem:[#allocation3 + $0x18] sm:$0xff]
    %v63 = vld [vmem:[#allocation3 + $0x20] sm:$0xff]
    %v64 = vld [vmem:[#allocation3 + $0x28] sm:$0xff]
    %v65 = vld [vmem:[#allocation3 + $0x30] sm:$0xff]
    %v66 = vld [vmem:[#allocation3 + $0x38] sm:$0xff]
    %v67 = vld [vmem:[#allocation3 + $0x40] sm:$0xff]
    %v68 = vld [vmem:[#allocation3 + $0x48] sm:$0xff]
    %v69 = vld [vmem:[#allocation3 + $0x50] sm:$0xff]
    %v70 = vld [vmem:[#allocation3 + $0x58] sm:$0xff]
    %v71 = vld [vmem:[#allocation3 + $0x60] sm:$0xff]
    %v72 = vld [vmem:[#allocation3 + $0x68] sm:$0xff]
    %v73 = vld [vmem:[#allocation3 + $0x70] sm:$0xff]
    %v74 = vld [vmem:[#allocation3 + $0x78] sm:$0xff]
    %v75 = vld [vmem:[#allocation5] sm:$0xff]
    %v76 = vld [vmem:[#allocation5 + $0x8] sm:$0xff]
    %v77 = vld [vmem:[#allocation5 + $0x10] sm:$0xff]
    %v78 = vld [vmem:[#allocation5 + $0x18] sm:$0xff]
    %v79 = vld [vmem:[#allocation5 + $0x20] sm:$0xff]
    %v80 = vld [vmem:[#allocation5 + $0x28] sm:$0xff]
    %v81 = vld [vmem:[#allocation5 + $0x30] sm:$0xff]
    %v82 = vld [vmem:[#allocation5 + $0x38] sm:$0xff]
    %v83 = vld [vmem:[#allocation5 + $0x40] sm:$0xff]
    %v84 = vld [vmem:[#allocation5 + $0x48] sm:$0xff]
    %v85 = vld [vmem:[#allocation5 + $0x50] sm:$0xff]
    %v86 = vld [vmem:[#allocation5 + $0x58] sm:$0xff]
    %v87 = vld [vmem:[#allocation5 + $0x60] sm:$0xff]
    %v88 = vld [vmem:[#allocation5 + $0x68] sm:$0xff]
    %v89 = vld [vmem:[#allocation5 + $0x70] sm:$0xff]
    %v90 = vld [vmem:[#allocation5 + $0x78] sm:$0xff]
    %91 = vmatprep.subr.mxu0 0.0
    %92 = vmatpush1.msra.mxu0 %v90
    %93 = vmatprep.subr.mxu0 0.0
    %94 = vmatpush1.msra.mxu0 %v89
    %95 = vmatprep.subr.mxu0 0.0
    %96 = vmatpush1.msra.mxu0 %v88
    %97 = vmatprep.subr.mxu0 0.0
    %98 = vmatpush1.msra.mxu0 %v87
    %99 = vmatprep.subr.mxu0 0.0
    %100 = vmatpush1.msra.mxu0 %v86
    %101 = vmatprep.subr.mxu0 0.0
    %102 = vmatpush1.msra.mxu0 %v85
    %103 = vmatprep.subr.mxu0 0.0
    %104 = vmatpush1.msra.mxu0 %v84
    %105 = vmatprep.subr.mxu0 0.0
    %106 = vmatpush1.msra.mxu0 %v83
    %107 = vmatprep.subr.mxu0 0.0
    %108 = vmatpush1.msra.mxu0 %v82
    %109 = vmatprep.subr.mxu0 0.0
    %110 = vmatpush1.msra.mxu0 %v81
    %111 = vmatprep.subr.mxu0 0.0
    %112 = vmatpush1.msra.mxu0 %v80
    %113 = vmatprep.subr.mxu0 0.0
    %114 = vmatpush1.msra.mxu0 %v79
    %115 = vmatprep.subr.mxu0 0.0
    %116 = vmatpush1.msra.mxu0 %v78
    %117 = vmatprep.subr.mxu0 0.0
    %118 = vmatpush1.msra.mxu0 %v77
    %119 = vmatprep.subr.mxu0 0.0
    %120 = vmatpush1.msra.mxu0 %v76
    %121 = vmatprep.subr.mxu0 0.0
    %122 = vmatpush1.msra.mxu0 %v75
    %123 = vmatprep.subr.mxu0 0.0
    %124 = vmatpush2.msra.mxu0 0.0
    %125 = vmatprep.subr.mxu0 0.0
    %126 = vmatpush2.msra.mxu0 0.0
    %127 = vmatprep.subr.mxu0 0.0
    %128 = vmatpush2.msra.mxu0 0.0
    %129 = vmatprep.subr.mxu0 0.0
    %130 = vmatpush2.msra.mxu0 0.0
    %131 = vmatprep.subr.mxu0 0.0
    %132 = vmatpush2.msra.mxu0 0.0
    %133 = vmatprep.subr.mxu0 0.0
    %134 = vmatpush2.msra.mxu0 0.0
    %135 = vmatprep.subr.mxu0 0.0
    %136 = vmatpush2.msra.mxu0 0.0
    %137 = vmatprep.subr.mxu0 0.0
    %138 = vmatpush2.msra.mxu0 0.0
    %139 = vmatprep.subr.mxu0 0.0
    %140 = vmatpush2.msra.mxu0 0.0
    %141 = vmatprep.subr.mxu0 0.0
    %142 = vmatpush2.msra.mxu0 0.0
    %143 = vmatprep.subr.mxu0 0.0
    %144 = vmatpush2.msra.mxu0 0.0
    %145 = vmatprep.subr.mxu0 0.0
    %146 = vmatpush2.msra.mxu0 0.0
    %147 = vmatprep.subr.mxu0 0.0
    %148 = vmatpush2.msra.mxu0 0.0
    %149 = vmatprep.subr.mxu0 0.0
    %150 = vmatpush2.msra.mxu0 0.0
    %151 = vmatprep.subr.mxu0 0.0
    %152 = vmatpush2.msra.mxu0 0.0
    %153 = vmatprep.subr.mxu0 0.0
    %154 = vmatpush2.msra.mxu0 0.0
    %155 = vmatprep.mubr.f32.mxu0 0.0
    %156 = vmatmul.mubr.f32.gmra.mxu0 %v59
    %v157 = vpop.f32.mrf.mxu0
    %v158 = vadd.f32 0.0, %v157
    %v159 = vpop.f32.mrf.mxu0
    %160 = vmatprep.mubr.f32.mxu0 0.0
    %161 = vmatmul.mubr.f32.gmra.mxu0 %v60
    %v162 = vpop.f32.mrf.mxu0
    %v163 = vadd.f32 0.0, %v162
    %v164 = vpop.f32.mrf.mxu0
    %165 = vmatprep.mubr.f32.mxu0 0.0
    %166 = vmatmul.mubr.f32.gmra.mxu0 %v61
    %v167 = vpop.f32.mrf.mxu0
    %v168 = vadd.f32 0.0, %v167
    %v169 = vpop.f32.mrf.mxu0
    %170 = vmatprep.mubr.f32.mxu0 0.0
    %171 = vmatmul.mubr.f32.gmra.mxu0 %v62
    %v172 = vpop.f32.mrf.mxu0
    %v173 = vadd.f32 0.0, %v172
    %v174 = vpop.f32.mrf.mxu0
    %175 = vmatprep.mubr.f32.mxu0 0.0
    %176 = vmatmul.mubr.f32.gmra.mxu0 %v63
    %v177 = vpop.f32.mrf.mxu0
    %v178 = vadd.f32 0.0, %v177
    %v179 = vpop.f32.mrf.mxu0
    %180 = vmatprep.mubr.f32.mxu0 0.0
    %181 = vmatmul.mubr.f32.gmra.mxu0 %v64
    %v182 = vpop.f32.mrf.mxu0
    %v183 = vadd.f32 0.0, %v182
    %v184 = vpop.f32.mrf.mxu0
    %185 = vmatprep.mubr.f32.mxu0 0.0
    %186 = vmatmul.mubr.f32.gmra.mxu0 %v65
    %v187 = vpop.f32.mrf.mxu0
    %v188 = vadd.f32 0.0, %v187
    %v189 = vpop.f32.mrf.mxu0
    %190 = vmatprep.mubr.f32.mxu0 0.0
    %191 = vmatmul.mubr.f32.gmra.mxu0 %v66
    %v192 = vpop.f32.mrf.mxu0
    %v193 = vadd.f32 0.0, %v192
    %v194 = vpop.f32.mrf.mxu0
    %195 = vmatprep.mubr.f32.mxu0 0.0
    %196 = vmatmul.mubr.f32.gmra.mxu0 %v67
    %v197 = vpop.f32.mrf.mxu0
    %v198 = vadd.f32 0.0, %v197
    %v199 = vpop.f32.mrf.mxu0
    %200 = vmatprep.mubr.f32.mxu0 0.0
    %201 = vmatmul.mubr.f32.gmra.mxu0 %v68
    %v202 = vpop.f32.mrf.mxu0
    %v203 = vadd.f32 0.0, %v202
    %v204 = vpop.f32.mrf.mxu0
    %205 = vmatprep.mubr.f32.mxu0 0.0
    %206 = vmatmul.mubr.f32.gmra.mxu0 %v69
    %v207 = vpop.f32.mrf.mxu0
    %v208 = vadd.f32 0.0, %v207
    %v209 = vpop.f32.mrf.mxu0
    %210 = vmatprep.mubr.f32.mxu0 0.0
    %211 = vmatmul.mubr.f32.gmra.mxu0 %v70
    %v212 = vpop.f32.mrf.mxu0
    %v213 = vadd.f32 0.0, %v212
    %v214 = vpop.f32.mrf.mxu0
    %215 = vmatprep.mubr.f32.mxu0 0.0
    %216 = vmatmul.mubr.f32.gmra.mxu0 %v71
    %v217 = vpop.f32.mrf.mxu0
    %v218 = vadd.f32 0.0, %v217
    %v219 = vpop.f32.mrf.mxu0
    %220 = vmatprep.mubr.f32.mxu0 0.0
    %221 = vmatmul.mubr.f32.gmra.mxu0 %v72
    %v222 = vpop.f32.mrf.mxu0
    %v223 = vadd.f32 0.0, %v222
    %v224 = vpop.f32.mrf.mxu0
    %225 = vmatprep.mubr.f32.mxu0 0.0
    %226 = vmatmul.mubr.f32.gmra.mxu0 %v73
    %v227 = vpop.f32.mrf.mxu0
    %v228 = vadd.f32 0.0, %v227
    %v229 = vpop.f32.mrf.mxu0
    %230 = vmatprep.mubr.f32.mxu0 0.0
    %231 = vmatmul.mubr.f32.gmra.mxu0 %v74
    %v232 = vpop.f32.mrf.mxu0
    %v233 = vadd.f32 0.0, %v232
    %v234 = vpop.f32.mrf.mxu0
    %235 = vdwg.mxu0
    %v236 = vlaneseq
    %v237 = vshrl.u32 %v236, 7
    %v238 = vadd.s32 %v237, 8
    %v239 = vadd.s32 %v237, 16
    %v240 = vadd.s32 %v237, 24
    %v241 = vadd.s32 %v237, 32
    %v242 = vadd.s32 %v237, 40
    %v243 = vadd.s32 %v237, 48
    %v244 = vadd.s32 %v237, 56
    %v245 = vadd.s32 %v237, 64
    %v246 = vadd.s32 %v237, 72
    %v247 = vadd.s32 %v237, 80
    %v248 = vadd.s32 %v237, 88
    %v249 = vadd.s32 %v237, 96
    %v250 = vadd.s32 %v237, 104
    %v251 = vadd.s32 %v237, 112
    %v252 = vadd.s32 %v237, 120
    %v253 = vlaneseq
    %v254 = vand.u32 %v253, 127
    %v255 = vsub.s32 %v254, %v237
    %v256 = vsub.s32 %v254, %v238
    %v257 = vsub.s32 %v254, %v239
    %v258 = vsub.s32 %v254, %v240
    %v259 = vsub.s32 %v254, %v241
    %v260 = vsub.s32 %v254, %v242
    %v261 = vsub.s32 %v254, %v243
    %v262 = vsub.s32 %v254, %v244
    %v263 = vsub.s32 %v254, %v245
    %v264 = vsub.s32 %v254, %v246
    %v265 = vsub.s32 %v254, %v247
    %v266 = vsub.s32 %v254, %v248
    %v267 = vsub.s32 %v254, %v249
    %v268 = vsub.s32 %v254, %v250
    %v269 = vsub.s32 %v254, %v251
    %v270 = vsub.s32 %v254, %v252
    %s271 = smul.u32 0, 128
    %s272 = smul.u32 0, 128
    %s273 = ssub.s32 %s271, %s272
    %v274 = vstv %s273
    %vm275 = vcmp.eq.s32.totalorder %v255, %v274
    %vm276 = vcmp.eq.s32.totalorder %v256, %v274
    %vm277 = vcmp.eq.s32.totalorder %v257, %v274
    %vm278 = vcmp.eq.s32.totalorder %v258, %v274
    %vm279 = vcmp.eq.s32.totalorder %v259, %v274
    %vm280 = vcmp.eq.s32.totalorder %v260, %v274
    %vm281 = vcmp.eq.s32.totalorder %v261, %v274
    %vm282 = vcmp.eq.s32.totalorder %v262, %v274
    %vm283 = vcmp.eq.s32.totalorder %v263, %v274
    %vm284 = vcmp.eq.s32.totalorder %v264, %v274
    %vm285 = vcmp.eq.s32.totalorder %v265, %v274
    %vm286 = vcmp.eq.s32.totalorder %v266, %v274
    %vm287 = vcmp.eq.s32.totalorder %v267, %v274
    %vm288 = vcmp.eq.s32.totalorder %v268, %v274
    %vm289 = vcmp.eq.s32.totalorder %v269, %v274
    %vm290 = vcmp.eq.s32.totalorder %v270, %v274
    %v291 = vsel %vm275, -1.0, %v158
    %v292 = vsel %vm276, -1.0, %v163
    %v293 = vsel %vm277, -1.0, %v168
    %v294 = vsel %vm278, -1.0, %v173
    %v295 = vsel %vm279, -1.0, %v178
    %v296 = vsel %vm280, -1.0, %v183
    %v297 = vsel %vm281, -1.0, %v188
    %v298 = vsel %vm282, -1.0, %v193
    %v299 = vsel %vm283, -1.0, %v198
    %v300 = vsel %vm284, -1.0, %v203
    %v301 = vsel %vm285, -1.0, %v208
    %v302 = vsel %vm286, -1.0, %v213
    %v303 = vsel %vm287, -1.0, %v218
    %v304 = vsel %vm288, -1.0, %v223
    %v305 = vsel %vm289, -1.0, %v228
    %v306 = vsel %vm290, -1.0, %v233
    %s307 = ssub.s32 16, %s272
    %v308 = vstv %s307
    %vm309 = vcmp.ge.s32.totalorder %v254, %v308
    %v310 = vsel %vm309, -3.0, %v291
    %v311 = vsel %vm309, -3.0, %v292
    %v312 = vsel %vm309, -3.0, %v293
    %v313 = vsel %vm309, -3.0, %v294
    %v314 = vsel %vm309, -3.0, %v295
    %v315 = vsel %vm309, -3.0, %v296
    %v316 = vsel %vm309, -3.0, %v297
    %v317 = vsel %vm309, -3.0, %v298
    %v318 = vsel %vm309, -3.0, %v299
    %v319 = vsel %vm309, -3.0, %v300
    %v320 = vsel %vm309, -3.0, %v301
    %v321 = vsel %vm309, -3.0, %v302
    %v322 = vsel %vm309, -3.0, %v303
    %v323 = vsel %vm309, -3.0, %v304
    %v324 = vsel %vm309, -3.0, %v305
    %v325 = vsel %vm309, -3.0, %v306
    %v326 = vld [vmem:[#allocation2] sm:$0xff]
    %v327 = vld [vmem:[#allocation2 + $0x8] sm:$0xff]
    %v328 = vld [vmem:[#allocation2 + $0x10] sm:$0xff]
    %v329 = vld [vmem:[#allocation2 + $0x18] sm:$0xff]
    %v330 = vld [vmem:[#allocation2 + $0x20] sm:$0xff]
    %v331 = vld [vmem:[#allocation2 + $0x28] sm:$0xff]
    %v332 = vld [vmem:[#allocation2 + $0x30] sm:$0xff]
    %v333 = vld [vmem:[#allocation2 + $0x38] sm:$0xff]
    %v334 = vld [vmem:[#allocation2 + $0x40] sm:$0xff]
    %v335 = vld [vmem:[#allocation2 + $0x48] sm:$0xff]
    %v336 = vld [vmem:[#allocation2 + $0x50] sm:$0xff]
    %v337 = vld [vmem:[#allocation2 + $0x58] sm:$0xff]
    %v338 = vld [vmem:[#allocation2 + $0x60] sm:$0xff]
    %v339 = vld [vmem:[#allocation2 + $0x68] sm:$0xff]
    %v340 = vld [vmem:[#allocation2 + $0x70] sm:$0xff]
    %v341 = vld [vmem:[#allocation2 + $0x78] sm:$0xff]
    %v342 = vmax.f32 %v326, %v310
    %v343 = vmax.f32 %v327, %v311
    %v344 = vmax.f32 %v328, %v312
    %v345 = vmax.f32 %v329, %v313
    %v346 = vmax.f32 %v330, %v314
    %v347 = vmax.f32 %v331, %v315
    %v348 = vmax.f32 %v332, %v316
    %v349 = vmax.f32 %v333, %v317
    %v350 = vmax.f32 %v334, %v318
    %v351 = vmax.f32 %v335, %v319
    %v352 = vmax.f32 %v336, %v320
    %v353 = vmax.f32 %v337, %v321
    %v354 = vmax.f32 %v338, %v322
    %v355 = vmax.f32 %v339, %v323
    %v356 = vmax.f32 %v340, %v324
    %v357 = vmax.f32 %v341, %v325
    %358 = vst [vmem:[#allocation2] sm:$0xff] %v342
    %359 = vst [vmem:[#allocation2 + $0x8] sm:$0xff] %v343
    %360 = vst [vmem:[#allocation2 + $0x10] sm:$0xff] %v344
    %361 = vst [vmem:[#allocation2 + $0x18] sm:$0xff] %v345
    %362 = vst [vmem:[#allocation2 + $0x20] sm:$0xff] %v346
    %363 = vst [vmem:[#allocation2 + $0x28] sm:$0xff] %v347
    %364 = vst [vmem:[#allocation2 + $0x30] sm:$0xff] %v348
    %365 = vst [vmem:[#allocation2 + $0x38] sm:$0xff] %v349
    %366 = vst [vmem:[#allocation2 + $0x40] sm:$0xff] %v350
    %367 = vst [vmem:[#allocation2 + $0x48] sm:$0xff] %v351
    %368 = vst [vmem:[#allocation2 + $0x50] sm:$0xff] %v352
    %369 = vst [vmem:[#allocation2 + $0x58] sm:$0xff] %v353
    %370 = vst [vmem:[#allocation2 + $0x60] sm:$0xff] %v354
    %371 = vst [vmem:[#allocation2 + $0x68] sm:$0xff] %v355
    %372 = vst [vmem:[#allocation2 + $0x70] sm:$0xff] %v356
    %373 = vst [vmem:[#allocation2 + $0x78] sm:$0xff] %v357
    // Predicated region
    $region22: #{tpu_custom_call.1} parent=1 // pred_check
      %p374 = pneg %p39
    $region23: #{tpu_custom_call.1} parent=1 // pred_check_branch
      %376 = sbr.rel (%p374) target = $region25
    $region24: #{tpu_custom_call.1} parent=1 // pred_region
      %v377 = vld [vmem:[#allocation2] sm:$0xff]
      %v378 = vld [vmem:[#allocation2 + $0x8] sm:$0xff]
      %v379 = vld [vmem:[#allocation2 + $0x10] sm:$0xff]
      %v380 = vld [vmem:[#allocation2 + $0x18] sm:$0xff]
      %v381 = vld [vmem:[#allocation2 + $0x20] sm:$0xff]
      %v382 = vld [vmem:[#allocation2 + $0x28] sm:$0xff]
      %v383 = vld [vmem:[#allocation2 + $0x30] sm:$0xff]
      %v384 = vld [vmem:[#allocation2 + $0x38] sm:$0xff]
      %v385 = vld [vmem:[#allocation2 + $0x40] sm:$0xff]
      %v386 = vld [vmem:[#allocation2 + $0x48] sm:$0xff]
      %v387 = vld [vmem:[#allocation2 + $0x50] sm:$0xff]
      %v388 = vld [vmem:[#allocation2 + $0x58] sm:$0xff]
      %v389 = vld [vmem:[#allocation2 + $0x60] sm:$0xff]
      %v390 = vld [vmem:[#allocation2 + $0x68] sm:$0xff]
      %v391 = vld [vmem:[#allocation2 + $0x70] sm:$0xff]
      %v392 = vld [vmem:[#allocation2 + $0x78] sm:$0xff]
      %393 = vmax.xlane.f32.xlu0 %v377
      %v394 = vpop.xlane.xlu0 %393
      %395 = vmax.xlane.f32.xlu0 %v378
      %v396 = vpop.xlane.xlu0 %395
      %397 = vmax.xlane.f32.xlu0 %v379
      %v398 = vpop.xlane.xlu0 %397
      %399 = vmax.xlane.f32.xlu0 %v380
      %v400 = vpop.xlane.xlu0 %399
      %401 = vmax.xlane.f32.xlu0 %v381
      %v402 = vpop.xlane.xlu0 %401
      %403 = vmax.xlane.f32.xlu0 %v382
      %v404 = vpop.xlane.xlu0 %403
      %405 = vmax.xlane.f32.xlu0 %v383
      %v406 = vpop.xlane.xlu0 %405
      %407 = vmax.xlane.f32.xlu0 %v384
      %v408 = vpop.xlane.xlu0 %407
      %409 = vmax.xlane.f32.xlu0 %v385
      %v410 = vpop.xlane.xlu0 %409
      %411 = vmax.xlane.f32.xlu0 %v386
      %v412 = vpop.xlane.xlu0 %411
      %413 = vmax.xlane.f32.xlu0 %v387
      %v414 = vpop.xlane.xlu0 %413
      %415 = vmax.xlane.f32.xlu0 %v388
      %v416 = vpop.xlane.xlu0 %415
      %417 = vmax.xlane.f32.xlu0 %v389
      %v418 = vpop.xlane.xlu0 %417
      %419 = vmax.xlane.f32.xlu0 %v390
      %v420 = vpop.xlane.xlu0 %419
      %421 = vmax.xlane.f32.xlu0 %v391
      %v422 = vpop.xlane.xlu0 %421
      %423 = vmax.xlane.f32.xlu0 %v392
      %v424 = vpop.xlane.xlu0 %423
      %v425 = vmul.f32 %v394, 2.0
      %v426 = vmul.f32 %v396, 2.0
      %v427 = vmul.f32 %v398, 2.0
      %v428 = vmul.f32 %v400, 2.0
      %v429 = vmul.f32 %v402, 2.0
      %v430 = vmul.f32 %v404, 2.0
      %v431 = vmul.f32 %v406, 2.0
      %v432 = vmul.f32 %v408, 2.0
      %v433 = vmul.f32 %v410, 2.0
      %v434 = vmul.f32 %v412, 2.0
      %v435 = vmul.f32 %v414, 2.0
      %v436 = vmul.f32 %v416, 2.0
      %v437 = vmul.f32 %v418, 2.0
      %v438 = vmul.f32 %v420, 2.0
      %v439 = vmul.f32 %v422, 2.0
      %v440 = vmul.f32 %v424, 2.0
      %v441 = vsub.f32 2.0, %v425
      %v442 = vsub.f32 2.0, %v426
      %v443 = vsub.f32 2.0, %v427
      %v444 = vsub.f32 2.0, %v428
      %v445 = vsub.f32 2.0, %v429
      %v446 = vsub.f32 2.0, %v430
      %v447 = vsub.f32 2.0, %v431
      %v448 = vsub.f32 2.0, %v432
      %v449 = vsub.f32 2.0, %v433
      %v450 = vsub.f32 2.0, %v434
      %v451 = vsub.f32 2.0, %v435
      %v452 = vsub.f32 2.0, %v436
      %v453 = vsub.f32 2.0, %v437
      %v454 = vsub.f32 2.0, %v438
      %v455 = vsub.f32 2.0, %v439
      %v456 = vsub.f32 2.0, %v440
      %v457 = vmax.f32 %v441, 0.0
      %v458 = vmax.f32 %v442, 0.0
      %v459 = vmax.f32 %v443, 0.0
      %v460 = vmax.f32 %v444, 0.0
      %v461 = vmax.f32 %v445, 0.0
      %v462 = vmax.f32 %v446, 0.0
      %v463 = vmax.f32 %v447, 0.0
      %v464 = vmax.f32 %v448, 0.0
      %v465 = vmax.f32 %v449, 0.0
      %v466 = vmax.f32 %v450, 0.0
      %v467 = vmax.f32 %v451, 0.0
      %v468 = vmax.f32 %v452, 0.0
      %v469 = vmax.f32 %v453, 0.0
      %v470 = vmax.f32 %v454, 0.0
      %v471 = vmax.f32 %v455, 0.0
      %v472 = vmax.f32 %v456, 0.0
      %v473 = vrsqrt.pop %v457
      %v474 = vmul.f32 %v457, %v473
      %vm475 = vcmp.eq.f32.partialorder %v457, inf
      %v476 = vsel %vm475, %v457, %v474
      %vm477 = vcmp.eq.f32.partialorder %v457, 0.0
      %v478 = vand.u32 %v457, 2147483648
      %v479 = vsel %vm477, %v478, %v476
      %v480 = vrsqrt.pop %v458
      %v481 = vmul.f32 %v458, %v480
      %vm482 = vcmp.eq.f32.partialorder %v458, inf
      %v483 = vsel %vm482, %v458, %v481
      %vm484 = vcmp.eq.f32.partialorder %v458, 0.0
      %v485 = vand.u32 %v458, 2147483648
      %v486 = vsel %vm484, %v485, %v483
      %v487 = vrsqrt.pop %v459
      %v488 = vmul.f32 %v459, %v487
      %vm489 = vcmp.eq.f32.partialorder %v459, inf
      %v490 = vsel %vm489, %v459, %v488
      %vm491 = vcmp.eq.f32.partialorder %v459, 0.0
      %v492 = vand.u32 %v459, 2147483648
      %v493 = vsel %vm491, %v492, %v490
      %v494 = vrsqrt.pop %v460
      %v495 = vmul.f32 %v460, %v494
      %vm496 = vcmp.eq.f32.partialorder %v460, inf
      %v497 = vsel %vm496, %v460, %v495
      %vm498 = vcmp.eq.f32.partialorder %v460, 0.0
      %v499 = vand.u32 %v460, 2147483648
      %v500 = vsel %vm498, %v499, %v497
      %v501 = vrsqrt.pop %v461
      %v502 = vmul.f32 %v461, %v501
      %vm503 = vcmp.eq.f32.partialorder %v461, inf
      %v504 = vsel %vm503, %v461, %v502
      %vm505 = vcmp.eq.f32.partialorder %v461, 0.0
      %v506 = vand.u32 %v461, 2147483648
      %v507 = vsel %vm505, %v506, %v504
      %v508 = vrsqrt.pop %v462
      %v509 = vmul.f32 %v462, %v508
      %vm510 = vcmp.eq.f32.partialorder %v462, inf
      %v511 = vsel %vm510, %v462, %v509
      %vm512 = vcmp.eq.f32.partialorder %v462, 0.0
      %v513 = vand.u32 %v462, 2147483648
      %v514 = vsel %vm512, %v513, %v511
      %v515 = vrsqrt.pop %v463
      %v516 = vmul.f32 %v463, %v515
      %vm517 = vcmp.eq.f32.partialorder %v463, inf
      %v518 = vsel %vm517, %v463, %v516
      %vm519 = vcmp.eq.f32.partialorder %v463, 0.0
      %v520 = vand.u32 %v463, 2147483648
      %v521 = vsel %vm519, %v520, %v518
      %v522 = vrsqrt.pop %v464
      %v523 = vmul.f32 %v464, %v522
      %vm524 = vcmp.eq.f32.partialorder %v464, inf
      %v525 = vsel %vm524, %v464, %v523
      %vm526 = vcmp.eq.f32.partialorder %v464, 0.0
      %v527 = vand.u32 %v464, 2147483648
      %v528 = vsel %vm526, %v527, %v525
      %v529 = vrsqrt.pop %v465
      %v530 = vmul.f32 %v465, %v529
      %vm531 = vcmp.eq.f32.partialorder %v465, inf
      %v532 = vsel %vm531, %v465, %v530
      %vm533 = vcmp.eq.f32.partialorder %v465, 0.0
      %v534 = vand.u32 %v465, 2147483648
      %v535 = vsel %vm533, %v534, %v532
      %v536 = vrsqrt.pop %v466
      %v537 = vmul.f32 %v466, %v536
      %vm538 = vcmp.eq.f32.partialorder %v466, inf
      %v539 = vsel %vm538, %v466, %v537
      %vm540 = vcmp.eq.f32.partialorder %v466, 0.0
      %v541 = vand.u32 %v466, 2147483648
      %v542 = vsel %vm540, %v541, %v539
      %v543 = vrsqrt.pop %v467
      %v544 = vmul.f32 %v467, %v543
      %vm545 = vcmp.eq.f32.partialorder %v467, inf
      %v546 = vsel %vm545, %v467, %v544
      %vm547 = vcmp.eq.f32.partialorder %v467, 0.0
      %v548 = vand.u32 %v467, 2147483648
      %v549 = vsel %vm547, %v548, %v546
      %v550 = vrsqrt.pop %v468
      %v551 = vmul.f32 %v468, %v550
      %vm552 = vcmp.eq.f32.partialorder %v468, inf
      %v553 = vsel %vm552, %v468, %v551
      %vm554 = vcmp.eq.f32.partialorder %v468, 0.0
      %v555 = vand.u32 %v468, 2147483648
      %v556 = vsel %vm554, %v555, %v553
      %v557 = vrsqrt.pop %v469
      %v558 = vmul.f32 %v469, %v557
      %vm559 = vcmp.eq.f32.partialorder %v469, inf
      %v560 = vsel %vm559, %v469, %v558
      %vm561 = vcmp.eq.f32.partialorder %v469, 0.0
      %v562 = vand.u32 %v469, 2147483648
      %v563 = vsel %vm561, %v562, %v560
      %v564 = vrsqrt.pop %v470
      %v565 = vmul.f32 %v470, %v564
      %vm566 = vcmp.eq.f32.partialorder %v470, inf
      %v567 = vsel %vm566, %v470, %v565
      %vm568 = vcmp.eq.f32.partialorder %v470, 0.0
      %v569 = vand.u32 %v470, 2147483648
      %v570 = vsel %vm568, %v569, %v567
      %v571 = vrsqrt.pop %v471
      %v572 = vmul.f32 %v471, %v571
      %vm573 = vcmp.eq.f32.partialorder %v471, inf
      %v574 = vsel %vm573, %v471, %v572
      %vm575 = vcmp.eq.f32.partialorder %v471, 0.0
      %v576 = vand.u32 %v471, 2147483648
      %v577 = vsel %vm575, %v576, %v574
      %v578 = vrsqrt.pop %v472
      %v579 = vmul.f32 %v472, %v578
      %vm580 = vcmp.eq.f32.partialorder %v472, inf
      %v581 = vsel %vm580, %v472, %v579
      %vm582 = vcmp.eq.f32.partialorder %v472, 0.0
      %v583 = vand.u32 %v472, 2147483648
      %v584 = vsel %vm582, %v583, %v581
      %v585 = vadd.f32 %v479, 1e-08
      %v586 = vadd.f32 %v486, 1e-08
      %v587 = vadd.f32 %v493, 1e-08
      %v588 = vadd.f32 %v500, 1e-08
      %v589 = vadd.f32 %v507, 1e-08
      %v590 = vadd.f32 %v514, 1e-08
      %v591 = vadd.f32 %v521, 1e-08
      %v592 = vadd.f32 %v528, 1e-08
      %v593 = vadd.f32 %v535, 1e-08
      %v594 = vadd.f32 %v542, 1e-08
      %v595 = vadd.f32 %v549, 1e-08
      %v596 = vadd.f32 %v556, 1e-08
      %v597 = vadd.f32 %v563, 1e-08
      %v598 = vadd.f32 %v570, 1e-08
      %v599 = vadd.f32 %v577, 1e-08
      %v600 = vadd.f32 %v584, 1e-08
      %v601 = vlog2.pop %v585
      %v602 = vmul.f32 %v601, 0.6931472
      %v603 = vlog2.pop %v586
      %v604 = vmul.f32 %v603, 0.6931472
      %v605 = vlog2.pop %v587
      %v606 = vmul.f32 %v605, 0.6931472
      %v607 = vlog2.pop %v588
      %v608 = vmul.f32 %v607, 0.6931472
      %v609 = vlog2.pop %v589
      %v610 = vmul.f32 %v609, 0.6931472
      %v611 = vlog2.pop %v590
      %v612 = vmul.f32 %v611, 0.6931472
      %v613 = vlog2.pop %v591
      %v614 = vmul.f32 %v613, 0.6931472
      %v615 = vlog2.pop %v592
      %v616 = vmul.f32 %v615, 0.6931472
      %v617 = vlog2.pop %v593
      %v618 = vmul.f32 %v617, 0.6931472
      %v619 = vlog2.pop %v594
      %v620 = vmul.f32 %v619, 0.6931472
      %v621 = vlog2.pop %v595
      %v622 = vmul.f32 %v621, 0.6931472
      %v623 = vlog2.pop %v596
      %v624 = vmul.f32 %v623, 0.6931472
      %v625 = vlog2.pop %v597
      %v626 = vmul.f32 %v625, 0.6931472
      %v627 = vlog2.pop %v598
      %v628 = vmul.f32 %v627, 0.6931472
      %v629 = vlog2.pop %v599
      %v630 = vmul.f32 %v629, 0.6931472
      %v631 = vlog2.pop %v600
      %v632 = vmul.f32 %v631, 0.6931472
      %v633 = vsub.f32 0.0, %v602
      %v634 = vsub.f32 0.0, %v604
      %v635 = vsub.f32 0.0, %v606
      %v636 = vsub.f32 0.0, %v608
      %v637 = vsub.f32 0.0, %v610
      %v638 = vsub.f32 0.0, %v612
      %v639 = vsub.f32 0.0, %v614
      %v640 = vsub.f32 0.0, %v616
      %v641 = vsub.f32 0.0, %v618
      %v642 = vsub.f32 0.0, %v620
      %v643 = vsub.f32 0.0, %v622
      %v644 = vsub.f32 0.0, %v624
      %v645 = vsub.f32 0.0, %v626
      %v646 = vsub.f32 0.0, %v628
      %v647 = vsub.f32 0.0, %v630
      %v648 = vsub.f32 0.0, %v632
      %v649 = vstv %s271
      %v650 = vadd.s32 %v649, %v237
      %v651 = vadd.s32 %v649, %v238
      %v652 = vadd.s32 %v649, %v239
      %v653 = vadd.s32 %v649, %v240
      %v654 = vadd.s32 %v649, %v241
      %v655 = vadd.s32 %v649, %v242
      %v656 = vadd.s32 %v649, %v243
      %v657 = vadd.s32 %v649, %v244
      %v658 = vadd.s32 %v649, %v245
      %v659 = vadd.s32 %v649, %v246
      %v660 = vadd.s32 %v649, %v247
      %v661 = vadd.s32 %v649, %v248
      %v662 = vadd.s32 %v649, %v249
      %v663 = vadd.s32 %v649, %v250
      %v664 = vadd.s32 %v649, %v251
      %v665 = vadd.s32 %v649, %v252
      %vm666 = vcmp.lt.s32.totalorder %v650, 16
      %vm667 = vcmp.lt.s32.totalorder %v651, 16
      %vm668 = vcmp.lt.s32.totalorder %v652, 16
      %vm669 = vcmp.lt.s32.totalorder %v653, 16
      %vm670 = vcmp.lt.s32.totalorder %v654, 16
      %vm671 = vcmp.lt.s32.totalorder %v655, 16
      %vm672 = vcmp.lt.s32.totalorder %v656, 16
      %vm673 = vcmp.lt.s32.totalorder %v657, 16
      %vm674 = vcmp.lt.s32.totalorder %v658, 16
      %vm675 = vcmp.lt.s32.totalorder %v659, 16
      %vm676 = vcmp.lt.s32.totalorder %v660, 16
      %vm677 = vcmp.lt.s32.totalorder %v661, 16
      %vm678 = vcmp.lt.s32.totalorder %v662, 16
      %vm679 = vcmp.lt.s32.totalorder %v663, 16
      %vm680 = vcmp.lt.s32.totalorder %v664, 16
      %vm681 = vcmp.lt.s32.totalorder %v665, 16
      %v682 = vsel %vm666, %v633, 0.0
      %v683 = vsel %vm667, %v634, 0.0
      %v684 = vsel %vm668, %v635, 0.0
      %v685 = vsel %vm669, %v636, 0.0
      %v686 = vsel %vm670, %v637, 0.0
      %v687 = vsel %vm671, %v638, 0.0
      %v688 = vsel %vm672, %v639, 0.0
      %v689 = vsel %vm673, %v640, 0.0
      %v690 = vsel %vm674, %v641, 0.0
      %v691 = vsel %vm675, %v642, 0.0
      %v692 = vsel %vm676, %v643, 0.0
      %v693 = vsel %vm677, %v644, 0.0
      %v694 = vsel %vm678, %v645, 0.0
      %v695 = vsel %vm679, %v646, 0.0
      %v696 = vsel %vm680, %v647, 0.0
      %v697 = vsel %vm681, %v648, 0.0
      %vm698 = vcmask 7168
      %699 = vst.msk [vmem:[%s2] sm:$0xff] %vm698, %v682
      %700 = vst.msk [vmem:[%s2 + $0x8] sm:$0xff] %vm698, %v683
      %701 = vst.msk [vmem:[%s2 + $0x10] sm:$0xff] %vm698, %v684
      %702 = vst.msk [vmem:[%s2 + $0x18] sm:$0xff] %vm698, %v685
      %703 = vst.msk [vmem:[%s2 + $0x20] sm:$0xff] %vm698, %v686
      %704 = vst.msk [vmem:[%s2 + $0x28] sm:$0xff] %vm698, %v687
      %705 = vst.msk [vmem:[%s2 + $0x30] sm:$0xff] %vm698, %v688
      %706 = vst.msk [vmem:[%s2 + $0x38] sm:$0xff] %vm698, %v689
      %707 = vst.msk [vmem:[%s2 + $0x40] sm:$0xff] %vm698, %v690
      %708 = vst.msk [vmem:[%s2 + $0x48] sm:$0xff] %vm698, %v691
      %709 = vst.msk [vmem:[%s2 + $0x50] sm:$0xff] %vm698, %v692
      %710 = vst.msk [vmem:[%s2 + $0x58] sm:$0xff] %vm698, %v693
      %711 = vst.msk [vmem:[%s2 + $0x60] sm:$0xff] %vm698, %v694
      %712 = vst.msk [vmem:[%s2 + $0x68] sm:$0xff] %vm698, %v695
      %713 = vst.msk [vmem:[%s2 + $0x70] sm:$0xff] %vm698, %v696
      %714 = vst.msk [vmem:[%s2 + $0x78] sm:$0xff] %vm698, %v697
    $region25: #{tpu_custom_call.1} parent=1 // pred_fallthru
      _
    // Predicated region
    $region26: #{tpu_custom_call.1} parent=1 // pred_check
      _
    $region27: #{tpu_custom_call.1} parent=1 // pred_check_branch
      %716 = sbr.rel (0) target = $region29
    $region28: #{tpu_custom_call.1} parent=1 // pred_region
      _
    $region29: #{tpu_custom_call.1} parent=1 // pred_fallthru
      _
    // Predicated region
    $region30: #{tpu_custom_call.1} parent=1 // pred_check
      _
    $region31: #{tpu_custom_call.1} parent=1 // pred_check_branch
      %718 = sbr.rel (0) target = $region33
    $region32: #{tpu_custom_call.1} parent=1 // pred_region
      _
    $region33: #{tpu_custom_call.1} parent=1 // pred_fallthru
      _
    %719 = vsyncpa [#allocation4], 1
    %720 = vsyncpa [#allocation6], 1

</llo_original>
